<compile_context>
chip_gen: v6e
topology: v6e:2x2x1
jax: 0.10.0
libtpu: 0.0.40
codegen_flags: <defaults>
</compile_context>

<pallas_src>
import functools

import jax
import jax.numpy as jnp
from jax.experimental import pallas as pl
from jax.experimental.pallas import tpu as pltpu


def _round_up(x, n):
    return ((x + n - 1) // n) * n


def _dino_loss_kernel(temps_ref, center_ref, *refs, num_std, num_tea, n_diag,
                      m_total, tile_rows, tiles_per_chunk, needs_mask):
    """One (chunk, row-tile) step of the DINO loss.

    temps_ref  : SMEM (2,) f32 -> [temp_student, temp_teacher]
    center_ref : VMEM (1, D)
    refs       : num_std student tiles, num_tea teacher tiles (each
                 (tile_rows, D)), then loss_part_ref (1,1,128),
                 center_part_ref (1,1,D), loss_acc SMEM (1,),
                 center_acc VMEM (1, D).
    """
    student_refs = refs[:num_std]
    teacher_refs = refs[num_std:num_std + num_tea]
    (loss_part_ref, center_part_ref,
     loss_acc, center_acc) = refs[num_std + num_tea:]

    c = pl.program_id(0)          # chunk ("parallel" axis)
    r = pl.program_id(1)          # row tile within the chunk ("arbitrary")

    @pl.when(r == 0)
    def _init():
        loss_acc[0] = jnp.float32(0.0)
        center_acc[...] = jnp.zeros_like(center_acc)

    # Scalar reciprocals once per step; arrays only see multiplies.
    inv_ts = 1.0 / temps_ref[0]
    inv_tt = 1.0 / temps_ref[1]
    center = center_ref[...].astype(jnp.float32)            # (1, D)

    if needs_mask:
        row0 = (c * tiles_per_chunk + r) * tile_rows
        rows = row0 + jax.lax.broadcasted_iota(jnp.int32, (tile_rows, 1), 0)
        maskf = (rows < m_total).astype(jnp.float32)         # (tile_rows, 1)
    else:
        maskf = None

    def student_pass(i):
        s = student_refs[i][...].astype(jnp.float32) * inv_ts
        s = s - jnp.max(s, axis=-1, keepdims=True)            # shifted logits
        lse = jnp.log(jnp.sum(jnp.exp(s), axis=-1, keepdims=True))
        if maskf is not None:
            lse = lse * maskf                                  # padded rows -> 0
        return s, jnp.sum(lse)

    def teacher_pass(j):
        t = teacher_refs[j][...].astype(jnp.float32)
        # Raw (pre-centering) column sum for the center EMA.  Padded rows are
        # exact zeros from the wrapper, so no mask is needed here.
        # TODO(synk): offload to the idle MXU (ones(1,rows) @ t) if a bundle
        # dump ever shows XLU saturation.
        cs = jnp.sum(t, axis=0, keepdims=True)
        tl = (t - center) * inv_tt
        te = jnp.exp(tl - jnp.max(tl, axis=-1, keepdims=True))
        # Exact per-row normalization: this is a (rows, 1) path, essentially
        # free, and keeps sum_d t == 1 which the factorized loss relies on.
        tp = te / jnp.sum(te, axis=-1, keepdims=True)
        if maskf is not None:
            tp = tp * maskf                                    # padded rows -> 0
        return tp, cs

    s_sum = None                     # sum_i s_shift_i            (tile, D)
    t_sum = None                     # sum_j t_probs_j            (tile, D)
    col_sum = None                   # raw teacher column sum     (1, D)
    lse_total = jnp.float32(0.0)     # sum_i sum_b lse_i[b]
    diag_dot = jnp.float32(0.0)      # sum_{j<n_diag} sum t_j * s_shift_j
    diag_lse = jnp.float32(0.0)      # sum_{j<n_diag} sum_b lse_j[b]

    # Interleaved diagonal crops: s_shift_j and t_probs_j are only live
    # together inside this iteration (no per-crop tensors kept around).
    for idx in range(n_diag):
        s, lse_rows = student_pass(idx)
        tp, cs = teacher_pass(idx)
        diag_dot = diag_dot + jnp.sum(tp * s)
        diag_lse = diag_lse + lse_rows
        lse_total = lse_total + lse_rows
        s_sum = s if s_sum is None else s_sum + s
        t_sum = tp if t_sum is None else t_sum + tp
        col_sum = cs if col_sum is None else col_sum + cs

    for idx in range(n_diag, num_std):                 # remaining student crops
        s, lse_rows = student_pass(idx)
        lse_total = lse_total + lse_rows
        s_sum = s if s_sum is None else s_sum + s

    for idx in range(n_diag, num_tea):                 # remaining teacher crops
        tp, cs = teacher_pass(idx)
        t_sum = tp if t_sum is None else t_sum + tp
        col_sum = cs if col_sum is None else col_sum + cs

    # Factorized sum over all i != j pairs for the rows of this tile:
    #   sum_{i,j} t_j * (s_shift_i - lse_i)  minus the diagonal terms.
    cross = jnp.sum(t_sum * s_sum)
    tile_sum = (cross - jnp.float32(num_tea) * lse_total
                - (diag_dot - diag_lse))

    loss_acc[0] = loss_acc[0] + tile_sum
    center_acc[...] = center_acc[...] + col_sum

    @pl.when(r == pl.num_programs(1) - 1)
    def _finalize():
        # Per-chunk partial outputs; normalization + center EMA happen in the
        # wrapper so two TensorCores never write the same block.
        loss_part_ref[...] = jnp.full(loss_part_ref.shape, loss_acc[0],
                                      dtype=jnp.float32)
        center_part_ref[0] = center_acc[...]


def dino_loss(student_outs, teacher_outs, temp_student, temp_teacher,
              center, momentum_center=0.9, block_rows=128, num_chunks=2,
              min_dma_bytes=512 * 1024):
    """Pallas implementation of DINOLoss.forward.

    Returns (loss_scalar, updated_center).
      block_rows     : requested row tile (the DMA-size floor may raise it).
      num_chunks     : row-tile chunks on the leading "parallel" grid axis;
                       2 shards across v7x's TensorCores, harmless on v5e/v6e.
      min_dma_bytes  : per-crop per-step DMA floor so tiny-D cases do not
                       drown in fixed per-step overhead.
    """
    assert isinstance(student_outs, (tuple, list)) and len(student_outs) > 0
    assert isinstance(teacher_outs, (tuple, list)) and len(teacher_outs) > 0
    num_std = len(student_outs)
    num_tea = len(teacher_outs)
    m, feat_dim = student_outs[0].shape
    for x in list(student_outs) + list(teacher_outs):
        assert x.shape == (m, feat_dim)

    in_dtype = student_outs[0].dtype
    itemsize = jnp.dtype(in_dtype).itemsize
    sublane = {4: 8, 2: 16, 1: 32}.get(itemsize, 8)

    # --- row-tile selection: dtype-aware sublane multiple + DMA floor -------
    dma_rows = pl.cdiv(min_dma_bytes, feat_dim * itemsize) if min_dma_bytes else 1
    tile_rows = max(block_rows, dma_rows)
    tile_rows = min(tile_rows, _round_up(m, sublane))
    tile_rows = _round_up(tile_rows, sublane)

    n_tiles = pl.cdiv(m, tile_rows)
    num_chunks = max(1, min(num_chunks, n_tiles))
    tiles_per_chunk = pl.cdiv(n_tiles, num_chunks)
    padded_m = num_chunks * tiles_per_chunk * tile_rows
    needs_mask = padded_m != m

    def _pad(x):
        if padded_m == m:
            return x
        return jnp.pad(x, ((0, padded_m - m), (0, 0)))   # zero rows, masked

    student_p = [_pad(x) for x in student_outs]
    teacher_p = [_pad(x) for x in teacher_outs]

    # --- explicit scoped-VMEM limit from the real per-step footprint --------
    crop_bytes = 2 * (num_std + num_tea) * tile_rows * feat_dim * itemsize
    interm_bytes = 6 * tile_rows * feat_dim * 4          # s_sum, t_sum, s, t, ...
    fixed_bytes = 8 * feat_dim * 4 + 4 * num_chunks * (feat_dim + 128) * 4
    est = crop_bytes + interm_bytes + fixed_bytes
    vmem_limit = int(min(max(3 * est // 2 + (4 << 20), 32 << 20), 112 << 20))

    temps = jnp.array([temp_student, temp_teacher], dtype=jnp.float32)
    center32 = jnp.asarray(center, jnp.float32)

    crop_spec = pl.BlockSpec((tile_rows, feat_dim),
                             lambda c, r: (c * tiles_per_chunk + r, 0))
    kernel = functools.partial(
        _dino_loss_kernel, num_std=num_std, num_tea=num_tea,
        n_diag=min(num_std, num_tea), m_total=m, tile_rows=tile_rows,
        tiles_per_chunk=tiles_per_chunk, needs_mask=needs_mask)

    loss_parts, center_parts = pl.pallas_call(
        kernel,
        grid=(num_chunks, tiles_per_chunk),
        out_shape=(
            jax.ShapeDtypeStruct((num_chunks, 1, 128), jnp.float32),
            jax.ShapeDtypeStruct((num_chunks, 1, feat_dim), jnp.float32),
        ),
        in_specs=(
            [pl.BlockSpec(memory_space=pltpu.MemorySpace.SMEM),       # temps
             pl.BlockSpec((1, feat_dim), lambda c, r: (0, 0))]        # center
            + [crop_spec] * (num_std + num_tea)),                     # crops
        out_specs=(
            pl.BlockSpec((1, 1, 128), lambda c, r: (c, 0, 0)),        # loss part
            pl.BlockSpec((1, 1, feat_dim), lambda c, r: (c, 0, 0)),   # colsum part
        ),
        scratch_shapes=[
            pltpu.SMEM((1,), jnp.float32),            # running loss sum
            pltpu.VMEM((1, feat_dim), jnp.float32),   # running teacher col-sum
        ],
        compiler_params=pltpu.CompilerParams(
            dimension_semantics=("parallel", "arbitrary"),
            vmem_limit_bytes=vmem_limit),
    )(temps, center32, *student_p, *teacher_p)

    # Combine per-chunk partials; cheap (num_chunks x D) JAX ops.
    # Normalization matches the module: loss /= num_crops_std * num_crops_tea.
    loss = -jnp.sum(loss_parts[:, 0, 0]) / jnp.float32(m * num_std * num_tea)
    col_sum = jnp.sum(center_parts[:, 0, :], axis=0, keepdims=True)
    new_center = col_sum / jnp.float32(num_tea * m)
    upd_center = (momentum_center * center32
                  + (1.0 - momentum_center) * new_center)
    return loss, upd_center


def _dino_loss_ref(student_outs, teacher_outs, temp_student, temp_teacher,
                   center, momentum_center=0.9):
    """Pure-JAX reference matching the PyTorch semantics."""
    num_std = len(student_outs)
    num_tea = len(teacher_outs)
    student = jnp.concatenate(student_outs, axis=0).astype(jnp.float32)
    teacher = jnp.concatenate(teacher_outs, axis=0).astype(jnp.float32)
    new_center = jnp.mean(teacher, axis=0, keepdims=True)
    t_probs = jax.nn.softmax((teacher - center) / temp_teacher, axis=-1)
    s_logp = jax.nn.log_softmax(student / temp_student, axis=-1)
    s_chunks = jnp.split(s_logp, num_std, axis=0)
    t_chunks = jnp.split(t_probs, num_tea, axis=0)
    loss = 0.0
    for i, std in enumerate(s_chunks):
        for j, tea in enumerate(t_chunks):
            if i == j:
                continue
            loss = loss - jnp.mean(jnp.sum(tea * std, axis=-1))
    loss = loss / (num_std * num_tea)
    upd_center = momentum_center * center + (1.0 - momentum_center) * new_center
    return loss, upd_center


if __name__ == "__main__":
    num_std, num_tea = 4, 2
    feat_dim = 128
    temp_student, temp_teacher = 0.1, 0.04
    momentum_center = 0.9

    key = jax.random.PRNGKey(0)
    keys = jax.random.split(key, num_std + num_tea)

    def make_crops(m):
        s = [jax.random.normal(keys[i], (m, feat_dim), jnp.float32)
             for i in range(num_std)]
        t = [jax.random.normal(keys[num_std + j], (m, feat_dim), jnp.float32)
             for j in range(num_tea)]
        return s, t

    center = jnp.zeros((1, feat_dim), jnp.float32)   # module buffer init

    # --- case 1: divisible batch, 2 row tiles split across 2 chunks ---------
    s16, t16 = make_crops(16)
    loss, new_center = dino_loss(s16, t16, temp_student, temp_teacher, center,
                                 momentum_center, block_rows=8, num_chunks=2,
                                 min_dma_bytes=0)
    loss = jax.block_until_ready(loss)
    new_center = jax.block_until_ready(new_center)
    ref_loss, ref_center = _dino_loss_ref(s16, t16, temp_student, temp_teacher,
                                          center, momentum_center)
    assert jnp.allclose(loss, ref_loss, rtol=1e-4, atol=1e-4), (loss, ref_loss)
    assert jnp.allclose(new_center, ref_center, rtol=1e-5, atol=1e-6)

    # --- case 2: non-divisible batch -> zero-padded + masked last tiles -----
    s20, t20 = make_crops(20)
    loss2, center2 = dino_loss(s20, t20, temp_student, temp_teacher, center,
                               momentum_center, block_rows=8, num_chunks=2,
                               min_dma_bytes=0)
    jax.block_until_ready((loss2, center2))
    ref_loss2, ref_center2 = _dino_loss_ref(s20, t20, temp_student,
                                            temp_teacher, center,
                                            momentum_center)
    assert jnp.allclose(loss2, ref_loss2, rtol=1e-4, atol=1e-4), (loss2,
                                                                  ref_loss2)
    assert jnp.allclose(center2, ref_center2, rtol=1e-5, atol=1e-6)

    # --- case 3: bf16 crops (halves HBM reads); f32 accumulation in-kernel --
    s_bf = [x.astype(jnp.bfloat16) for x in s16]
    t_bf = [x.astype(jnp.bfloat16) for x in t16]
    loss3, center3 = dino_loss(s_bf, t_bf, temp_student, temp_teacher, center,
                               momentum_center, block_rows=16, num_chunks=2,
                               min_dma_bytes=0)
    jax.block_until_ready((loss3, center3))
    ref_loss3, ref_center3 = _dino_loss_ref(
        [x.astype(jnp.float32) for x in s_bf],
        [x.astype(jnp.float32) for x in t_bf],
        temp_student, temp_teacher, center, momentum_center)
    assert jnp.allclose(loss3, ref_loss3, rtol=1e-3, atol=1e-3), (loss3,
                                                                  ref_loss3)
    assert jnp.allclose(center3, ref_center3, rtol=1e-4, atol=1e-5)

    print("KERNEL_OK")
</pallas_src>

<mosaic_0001>
module attributes {stable_mosaic.version = 11 : i64} {
  func.func @_dino_loss_kernel(%arg0: i32, %arg1: i32, %arg2: memref<2xf32, #tpu.memory_space<smem>>, %arg3: memref<1x128xf32, #tpu.memory_space<vmem>>, %arg4: memref<8x128xf32, #tpu.memory_space<vmem>>, %arg5: memref<8x128xf32, #tpu.memory_space<vmem>>, %arg6: memref<8x128xf32, #tpu.memory_space<vmem>>, %arg7: memref<8x128xf32, #tpu.memory_space<vmem>>, %arg8: memref<8x128xf32, #tpu.memory_space<vmem>>, %arg9: memref<8x128xf32, #tpu.memory_space<vmem>>, %arg10: memref<1x1x128xf32, #tpu.memory_space<vmem>>, %arg11: memref<1x1x128xf32, #tpu.memory_space<vmem>>, %arg12: memref<1xf32, #tpu.memory_space<smem>>, %arg13: memref<1x128xf32, #tpu.memory_space<vmem>>) attributes {dimension_semantics = [#tpu.dimension_semantics<parallel>, #tpu.dimension_semantics<arbitrary>], iteration_bounds = array<i64: 2, 1>, scalar_prefetch = 0 : i64, scratch_operands = 2 : i64, tpu.core_type = #tpu.core_type<tc>, window_params = [{transform_indices = @transform_0, window_bounds = array<i64: 2>}, {pipeline_mode = #tpu.pipeline_mode<synchronous>, transform_indices = @transform_1, window_bounds = array<i64: 1, 128>}, {transform_indices = @transform_2, window_bounds = array<i64: 8, 128>}, {transform_indices = @transform_3, window_bounds = array<i64: 8, 128>}, {transform_indices = @transform_4, window_bounds = array<i64: 8, 128>}, {transform_indices = @transform_5, window_bounds = array<i64: 8, 128>}, {transform_indices = @transform_6, window_bounds = array<i64: 8, 128>}, {transform_indices = @transform_7, window_bounds = array<i64: 8, 128>}, {transform_indices = @transform_8, window_bounds = array<i64: 1, 1, 128>}, {transform_indices = @transform_9, window_bounds = array<i64: 1, 1, 128>}]} {
    %c0_i32 = arith.constant 0 : i32
    %0 = arith.cmpi eq, %arg1, %c0_i32 : i32
    %1 = arith.extui %0 : i1 to i32
    %c0_i32_0 = arith.constant 0 : i32
    %2 = arith.cmpi ne, %1, %c0_i32_0 : i32
    scf.if %2 {
      %cst_49 = arith.constant 0.000000e+00 : f32
      %c0_50 = arith.constant 0 : index
      %141 = memref.load %arg12[%c0_50] : memref<1xf32, #tpu.memory_space<smem>>
      memref.store %cst_49, %arg12[%c0_50] : memref<1xf32, #tpu.memory_space<smem>>
      %cst_51 = arith.constant 0.000000e+00 : f32
      %142 = vector.broadcast %cst_51 : f32 to vector<1x128xf32>
      %c0_52 = arith.constant 0 : index
      %c0_53 = arith.constant 0 : index
      %143 = vector.load %arg13[%c0_52, %c0_53] : memref<1x128xf32, #tpu.memory_space<vmem>>, vector<1x128xf32>
      tpu.vector_store %arg13[%c0_52, %c0_53], %142 {strides = array<i32>} : memref<1x128xf32, #tpu.memory_space<vmem>>, vector<1x128xf32>,
    } else {
    }
    %c0 = arith.constant 0 : index
    %3 = memref.load %arg2[%c0] : memref<2xf32, #tpu.memory_space<smem>>
    %cst = arith.constant 1.000000e+00 : f32
    %4 = arith.divf %cst, %3 : f32
    %c1 = arith.constant 1 : index
    %5 = memref.load %arg2[%c1] : memref<2xf32, #tpu.memory_space<smem>>
    %cst_1 = arith.constant 1.000000e+00 : f32
    %6 = arith.divf %cst_1, %5 : f32
    %c0_2 = arith.constant 0 : index
    %c0_3 = arith.constant 0 : index
    %7 = vector.load %arg3[%c0_2, %c0_3] : memref<1x128xf32, #tpu.memory_space<vmem>>, vector<1x128xf32>
    %c0_4 = arith.constant 0 : index
    %c0_5 = arith.constant 0 : index
    %8 = vector.load %arg4[%c0_4, %c0_5] : memref<8x128xf32, #tpu.memory_space<vmem>>, vector<8x128xf32>
    %9 = vector.broadcast %4 : f32 to vector<8x128xf32>
    %10 = arith.mulf %8, %9 : vector<8x128xf32>
    %cst_6 = arith.constant dense<0xFF800000> : vector<8xf32>
    %11 = vector.multi_reduction <maximumf>, %10, %cst_6 [1] : vector<8x128xf32> to vector<8xf32>
    %12 = vector.shape_cast %11 : vector<8xf32> to vector<8x1xf32>
    %13 = vector.broadcast %12 : vector<8x1xf32> to vector<8x128xf32>
    %14 = arith.subf %10, %13 : vector<8x128xf32>
    %15 = math.exp %14 : vector<8x128xf32>
    %cst_7 = arith.constant dense<0.000000e+00> : vector<8xf32>
    %16 = vector.multi_reduction <add>, %15, %cst_7 [1] : vector<8x128xf32> to vector<8xf32>
    %17 = vector.shape_cast %16 : vector<8xf32> to vector<8x1xf32>
    %18 = math.log %17 : vector<8x1xf32>
    %19 = vector.shape_cast %18 : vector<8x1xf32> to vector<1x8x1xf32>
    %cst_8 = arith.constant dense<0.000000e+00> : vector<1xf32>
    %20 = vector.multi_reduction <add>, %19, %cst_8 [1, 2] : vector<1x8x1xf32> to vector<1xf32>
    %21 = vector.shape_cast %20 : vector<1xf32> to vector<1x1x1xf32>
    %22 = vector.extract %21[0, 0, 0] : f32 from vector<1x1x1xf32>
    %c0_9 = arith.constant 0 : index
    %c0_10 = arith.constant 0 : index
    %23 = vector.load %arg8[%c0_9, %c0_10] : memref<8x128xf32, #tpu.memory_space<vmem>>, vector<8x128xf32>
    %cst_11 = arith.constant dense<0.000000e+00> : vector<128xf32>
    %24 = vector.multi_reduction <add>, %23, %cst_11 [0] : vector<8x128xf32> to vector<128xf32>
    %25 = vector.shape_cast %24 : vector<128xf32> to vector<1x128xf32>
    %26 = vector.broadcast %7 : vector<1x128xf32> to vector<8x128xf32>
    %27 = arith.subf %23, %26 : vector<8x128xf32>
    %28 = vector.broadcast %6 : f32 to vector<8x128xf32>
    %29 = arith.mulf %27, %28 : vector<8x128xf32>
    %cst_12 = arith.constant dense<0xFF800000> : vector<8xf32>
    %30 = vector.multi_reduction <maximumf>, %29, %cst_12 [1] : vector<8x128xf32> to vector<8xf32>
    %31 = vector.shape_cast %30 : vector<8xf32> to vector<8x1xf32>
    %32 = vector.broadcast %31 : vector<8x1xf32> to vector<8x128xf32>
    %33 = arith.subf %29, %32 : vector<8x128xf32>
    %34 = math.exp %33 : vector<8x128xf32>
    %cst_13 = arith.constant dense<0.000000e+00> : vector<8xf32>
    %35 = vector.multi_reduction <add>, %34, %cst_13 [1] : vector<8x128xf32> to vector<8xf32>
    %36 = vector.shape_cast %35 : vector<8xf32> to vector<8x1xf32>
    %37 = vector.broadcast %36 : vector<8x1xf32> to vector<8x128xf32>
    %38 = arith.divf %34, %37 : vector<8x128xf32>
    %39 = arith.mulf %38, %14 : vector<8x128xf32>
    %40 = vector.shape_cast %39 : vector<8x128xf32> to vector<1x8x128xf32>
    %cst_14 = arith.constant dense<0.000000e+00> : vector<1xf32>
    %41 = vector.multi_reduction <add>, %40, %cst_14 [1, 2] : vector<1x8x128xf32> to vector<1xf32>
    %42 = vector.shape_cast %41 : vector<1xf32> to vector<1x1x1xf32>
    %43 = vector.extract %42[0, 0, 0] : f32 from vector<1x1x1xf32>
    %cst_15 = arith.constant 0.000000e+00 : f32
    %44 = arith.addf %cst_15, %43 : f32
    %cst_16 = arith.constant 0.000000e+00 : f32
    %45 = arith.addf %cst_16, %22 : f32
    %cst_17 = arith.constant 0.000000e+00 : f32
    %46 = arith.addf %cst_17, %22 : f32
    %c0_18 = arith.constant 0 : index
    %c0_19 = arith.constant 0 : index
    %47 = vector.load %arg5[%c0_18, %c0_19] : memref<8x128xf32, #tpu.memory_space<vmem>>, vector<8x128xf32>
    %48 = vector.broadcast %4 : f32 to vector<8x128xf32>
    %49 = arith.mulf %47, %48 : vector<8x128xf32>
    %cst_20 = arith.constant dense<0xFF800000> : vector<8xf32>
    %50 = vector.multi_reduction <maximumf>, %49, %cst_20 [1] : vector<8x128xf32> to vector<8xf32>
    %51 = vector.shape_cast %50 : vector<8xf32> to vector<8x1xf32>
    %52 = vector.broadcast %51 : vector<8x1xf32> to vector<8x128xf32>
    %53 = arith.subf %49, %52 : vector<8x128xf32>
    %54 = math.exp %53 : vector<8x128xf32>
    %cst_21 = arith.constant dense<0.000000e+00> : vector<8xf32>
    %55 = vector.multi_reduction <add>, %54, %cst_21 [1] : vector<8x128xf32> to vector<8xf32>
    %56 = vector.shape_cast %55 : vector<8xf32> to vector<8x1xf32>
    %57 = math.log %56 : vector<8x1xf32>
    %58 = vector.shape_cast %57 : vector<8x1xf32> to vector<1x8x1xf32>
    %cst_22 = arith.constant dense<0.000000e+00> : vector<1xf32>
    %59 = vector.multi_reduction <add>, %58, %cst_22 [1, 2] : vector<1x8x1xf32> to vector<1xf32>
    %60 = vector.shape_cast %59 : vector<1xf32> to vector<1x1x1xf32>
    %61 = vector.extract %60[0, 0, 0] : f32 from vector<1x1x1xf32>
    %c0_23 = arith.constant 0 : index
    %c0_24 = arith.constant 0 : index
    %62 = vector.load %arg9[%c0_23, %c0_24] : memref<8x128xf32, #tpu.memory_space<vmem>>, vector<8x128xf32>
    %cst_25 = arith.constant dense<0.000000e+00> : vector<128xf32>
    %63 = vector.multi_reduction <add>, %62, %cst_25 [0] : vector<8x128xf32> to vector<128xf32>
    %64 = vector.shape_cast %63 : vector<128xf32> to vector<1x128xf32>
    %65 = vector.broadcast %7 : vector<1x128xf32> to vector<8x128xf32>
    %66 = arith.subf %62, %65 : vector<8x128xf32>
    %67 = vector.broadcast %6 : f32 to vector<8x128xf32>
    %68 = arith.mulf %66, %67 : vector<8x128xf32>
    %cst_26 = arith.constant dense<0xFF800000> : vector<8xf32>
    %69 = vector.multi_reduction <maximumf>, %68, %cst_26 [1] : vector<8x128xf32> to vector<8xf32>
    %70 = vector.shape_cast %69 : vector<8xf32> to vector<8x1xf32>
    %71 = vector.broadcast %70 : vector<8x1xf32> to vector<8x128xf32>
    %72 = arith.subf %68, %71 : vector<8x128xf32>
    %73 = math.exp %72 : vector<8x128xf32>
    %cst_27 = arith.constant dense<0.000000e+00> : vector<8xf32>
    %74 = vector.multi_reduction <add>, %73, %cst_27 [1] : vector<8x128xf32> to vector<8xf32>
    %75 = vector.shape_cast %74 : vector<8xf32> to vector<8x1xf32>
    %76 = vector.broadcast %75 : vector<8x1xf32> to vector<8x128xf32>
    %77 = arith.divf %73, %76 : vector<8x128xf32>
    %78 = arith.mulf %77, %53 : vector<8x128xf32>
    %79 = vector.shape_cast %78 : vector<8x128xf32> to vector<1x8x128xf32>
    %cst_28 = arith.constant dense<0.000000e+00> : vector<1xf32>
    %80 = vector.multi_reduction <add>, %79, %cst_28 [1, 2] : vector<1x8x128xf32> to vector<1xf32>
    %81 = vector.shape_cast %80 : vector<1xf32> to vector<1x1x1xf32>
    %82 = vector.extract %81[0, 0, 0] : f32 from vector<1x1x1xf32>
    %83 = arith.addf %44, %82 : f32
    %84 = arith.addf %45, %61 : f32
    %85 = arith.addf %46, %61 : f32
    %86 = arith.addf %14, %53 : vector<8x128xf32>
    %87 = arith.addf %38, %77 : vector<8x128xf32>
    %88 = arith.addf %25, %64 : vector<1x128xf32>
    %c0_29 = arith.constant 0 : index
    %c0_30 = arith.constant 0 : index
    %89 = vector.load %arg6[%c0_29, %c0_30] : memref<8x128xf32, #tpu.memory_space<vmem>>, vector<8x128xf32>
    %90 = vector.broadcast %4 : f32 to vector<8x128xf32>
    %91 = arith.mulf %89, %90 : vector<8x128xf32>
    %cst_31 = arith.constant dense<0xFF800000> : vector<8xf32>
    %92 = vector.multi_reduction <maximumf>, %91, %cst_31 [1] : vector<8x128xf32> to vector<8xf32>
    %93 = vector.shape_cast %92 : vector<8xf32> to vector<8x1xf32>
    %94 = vector.broadcast %93 : vector<8x1xf32> to vector<8x128xf32>
    %95 = arith.subf %91, %94 : vector<8x128xf32>
    %96 = math.exp %95 : vector<8x128xf32>
    %cst_32 = arith.constant dense<0.000000e+00> : vector<8xf32>
    %97 = vector.multi_reduction <add>, %96, %cst_32 [1] : vector<8x128xf32> to vector<8xf32>
    %98 = vector.shape_cast %97 : vector<8xf32> to vector<8x1xf32>
    %99 = math.log %98 : vector<8x1xf32>
    %100 = vector.shape_cast %99 : vector<8x1xf32> to vector<1x8x1xf32>
    %cst_33 = arith.constant dense<0.000000e+00> : vector<1xf32>
    %101 = vector.multi_reduction <add>, %100, %cst_33 [1, 2] : vector<1x8x1xf32> to vector<1xf32>
    %102 = vector.shape_cast %101 : vector<1xf32> to vector<1x1x1xf32>
    %103 = vector.extract %102[0, 0, 0] : f32 from vector<1x1x1xf32>
    %104 = arith.addf %85, %103 : f32
    %105 = arith.addf %86, %95 : vector<8x128xf32>
    %c0_34 = arith.constant 0 : index
    %c0_35 = arith.constant 0 : index
    %106 = vector.load %arg7[%c0_34, %c0_35] : memref<8x128xf32, #tpu.memory_space<vmem>>, vector<8x128xf32>
    %107 = vector.broadcast %4 : f32 to vector<8x128xf32>
    %108 = arith.mulf %106, %107 : vector<8x128xf32>
    %cst_36 = arith.constant dense<0xFF800000> : vector<8xf32>
    %109 = vector.multi_reduction <maximumf>, %108, %cst_36 [1] : vector<8x128xf32> to vector<8xf32>
    %110 = vector.shape_cast %109 : vector<8xf32> to vector<8x1xf32>
    %111 = vector.broadcast %110 : vector<8x1xf32> to vector<8x128xf32>
    %112 = arith.subf %108, %111 : vector<8x128xf32>
    %113 = math.exp %112 : vector<8x128xf32>
    %cst_37 = arith.constant dense<0.000000e+00> : vector<8xf32>
    %114 = vector.multi_reduction <add>, %113, %cst_37 [1] : vector<8x128xf32> to vector<8xf32>
    %115 = vector.shape_cast %114 : vector<8xf32> to vector<8x1xf32>
    %116 = math.log %115 : vector<8x1xf32>
    %117 = vector.shape_cast %116 : vector<8x1xf32> to vector<1x8x1xf32>
    %cst_38 = arith.constant dense<0.000000e+00> : vector<1xf32>
    %118 = vector.multi_reduction <add>, %117, %cst_38 [1, 2] : vector<1x8x1xf32> to vector<1xf32>
    %119 = vector.shape_cast %118 : vector<1xf32> to vector<1x1x1xf32>
    %120 = vector.extract %119[0, 0, 0] : f32 from vector<1x1x1xf32>
    %121 = arith.addf %104, %120 : f32
    %122 = arith.addf %105, %112 : vector<8x128xf32>
    %123 = arith.mulf %87, %122 : vector<8x128xf32>
    %124 = vector.shape_cast %123 : vector<8x128xf32> to vector<1x8x128xf32>
    %cst_39 = arith.constant dense<0.000000e+00> : vector<1xf32>
    %125 = vector.multi_reduction <add>, %124, %cst_39 [1, 2] : vector<1x8x128xf32> to vector<1xf32>
    %126 = vector.shape_cast %125 : vector<1xf32> to vector<1x1x1xf32>
    %127 = vector.extract %126[0, 0, 0] : f32 from vector<1x1x1xf32>
    %cst_40 = arith.constant 2.000000e+00 : f32
    %128 = arith.mulf %cst_40, %121 : f32
    %129 = arith.subf %127, %128 : f32
    %130 = arith.subf %83, %84 : f32
    %131 = arith.subf %129, %130 : f32
    %c0_41 = arith.constant 0 : index
    %132 = memref.load %arg12[%c0_41] : memref<1xf32, #tpu.memory_space<smem>>
    %133 = arith.addf %132, %131 : f32
    %c0_42 = arith.constant 0 : index
    %134 = memref.load %arg12[%c0_42] : memref<1xf32, #tpu.memory_space<smem>>
    memref.store %133, %arg12[%c0_42] : memref<1xf32, #tpu.memory_space<smem>>
    %c0_43 = arith.constant 0 : index
    %c0_44 = arith.constant 0 : index
    %135 = vector.load %arg13[%c0_43, %c0_44] : memref<1x128xf32, #tpu.memory_space<vmem>>, vector<1x128xf32>
    %136 = arith.addf %135, %88 : vector<1x128xf32>
    %c0_45 = arith.constant 0 : index
    %c0_46 = arith.constant 0 : index
    %137 = vector.load %arg13[%c0_45, %c0_46] : memref<1x128xf32, #tpu.memory_space<vmem>>, vector<1x128xf32>
    tpu.vector_store %arg13[%c0_45, %c0_46], %136 {strides = array<i32>} : memref<1x128xf32, #tpu.memory_space<vmem>>, vector<1x128xf32>,
    %c0_i32_47 = arith.constant 0 : i32
    %138 = arith.cmpi eq, %arg1, %c0_i32_47 : i32
    %139 = arith.extui %138 : i1 to i32
    %c0_i32_48 = arith.constant 0 : i32
    %140 = arith.cmpi ne, %139, %c0_i32_48 : i32
    scf.if %140 {
      %c0_49 = arith.constant 0 : index
      %141 = memref.load %arg12[%c0_49] : memref<1xf32, #tpu.memory_space<smem>>
      %142 = vector.broadcast %141 : f32 to vector<1x1x128xf32>
      %c0_50 = arith.constant 0 : index
      %c0_51 = arith.constant 0 : index
      %c0_52 = arith.constant 0 : index
      %143 = vector.load %arg10[%c0_50, %c0_51, %c0_52] : memref<1x1x128xf32, #tpu.memory_space<vmem>>, vector<1x1x128xf32>
      tpu.vector_store %arg10[%c0_50, %c0_51, %c0_52], %142 {strides = array<i32>} : memref<1x1x128xf32, #tpu.memory_space<vmem>>, vector<1x1x128xf32>,
      %c0_53 = arith.constant 0 : index
      %c0_54 = arith.constant 0 : index
      %144 = vector.load %arg13[%c0_53, %c0_54] : memref<1x128xf32, #tpu.memory_space<vmem>>, vector<1x128xf32>
      %c0_55 = arith.constant 0 : index
      %c0_56 = arith.constant 0 : index
      %c0_57 = arith.constant 0 : index
      %145 = vector.load %arg11[%c0_55, %c0_56, %c0_57] : memref<1x1x128xf32, #tpu.memory_space<vmem>>, vector<1x1x128xf32>
      %146 = vector.shape_cast %145 : vector<1x1x128xf32> to vector<1x128xf32>
      %147 = vector.shape_cast %144 : vector<1x128xf32> to vector<1x1x128xf32>
      tpu.vector_store %arg11[%c0_55, %c0_56, %c0_57], %147 {strides = array<i32>} : memref<1x1x128xf32, #tpu.memory_space<vmem>>, vector<1x1x128xf32>,
    } else {
    }
    return
  }
  func.func @transform_0(%arg0: i32, %arg1: i32) -> i32 {
    %c0_i32 = arith.constant 0 : i32
    %c0_i32_0 = arith.constant 0 : i32
    return %c0_i32 : i32
  }
  func.func @transform_1(%arg0: i32, %arg1: i32) -> (i32, i32) {
    %c0_i32 = arith.constant 0 : i32
    %c0_i32_0 = arith.constant 0 : i32
    %c0_i32_1 = arith.constant 0 : i32
    return %c0_i32, %c0_i32_0 : i32, i32
  }
  func.func @transform_2(%arg0: i32, %arg1: i32) -> (i32, i32) {
    %c1_i32 = arith.constant 1 : i32
    %0 = arith.muli %arg0, %c1_i32 : i32
    %1 = arith.addi %0, %arg1 : i32
    %c0_i32 = arith.constant 0 : i32
    %c0_i32_0 = arith.constant 0 : i32
    return %1, %c0_i32 : i32, i32
  }
  func.func @transform_3(%arg0: i32, %arg1: i32) -> (i32, i32) {
    %c1_i32 = arith.constant 1 : i32
    %0 = arith.muli %arg0, %c1_i32 : i32
    %1 = arith.addi %0, %arg1 : i32
    %c0_i32 = arith.constant 0 : i32
    %c0_i32_0 = arith.constant 0 : i32
    return %1, %c0_i32 : i32, i32
  }
  func.func @transform_4(%arg0: i32, %arg1: i32) -> (i32, i32) {
    %c1_i32 = arith.constant 1 : i32
    %0 = arith.muli %arg0, %c1_i32 : i32
    %1 = arith.addi %0, %arg1 : i32
    %c0_i32 = arith.constant 0 : i32
    %c0_i32_0 = arith.constant 0 : i32
    return %1, %c0_i32 : i32, i32
  }
  func.func @transform_5(%arg0: i32, %arg1: i32) -> (i32, i32) {
    %c1_i32 = arith.constant 1 : i32
    %0 = arith.muli %arg0, %c1_i32 : i32
    %1 = arith.addi %0, %arg1 : i32
    %c0_i32 = arith.constant 0 : i32
    %c0_i32_0 = arith.constant 0 : i32
    return %1, %c0_i32 : i32, i32
  }
  func.func @transform_6(%arg0: i32, %arg1: i32) -> (i32, i32) {
    %c1_i32 = arith.constant 1 : i32
    %0 = arith.muli %arg0, %c1_i32 : i32
    %1 = arith.addi %0, %arg1 : i32
    %c0_i32 = arith.constant 0 : i32
    %c0_i32_0 = arith.constant 0 : i32
    return %1, %c0_i32 : i32, i32
  }
  func.func @transform_7(%arg0: i32, %arg1: i32) -> (i32, i32) {
    %c1_i32 = arith.constant 1 : i32
    %0 = arith.muli %arg0, %c1_i32 : i32
    %1 = arith.addi %0, %arg1 : i32
    %c0_i32 = arith.constant 0 : i32
    %c0_i32_0 = arith.constant 0 : i32
    return %1, %c0_i32 : i32, i32
  }
  func.func @transform_8(%arg0: i32, %arg1: i32) -> (i32, i32, i32) {
    %c0_i32 = arith.constant 0 : i32
    %c0_i32_0 = arith.constant 0 : i32
    %c0_i32_1 = arith.constant 0 : i32
    return %arg0, %c0_i32, %c0_i32_0 : i32, i32, i32
  }
  func.func @transform_9(%arg0: i32, %arg1: i32) -> (i32, i32, i32) {
    %c0_i32 = arith.constant 0 : i32
    %c0_i32_0 = arith.constant 0 : i32
    %c0_i32_1 = arith.constant 0 : i32
    return %arg0, %c0_i32, %c0_i32_0 : i32, i32, i32
  }
}

</mosaic_0001>

<llo_original>
// kernel: tpu_custom_call.1
$region0: #{tpu_custom_call.1}
  #allocation0 [shape = 'u32[]', space=smem, size = 0x4, offset = 0x4, fixed_abs, tag = 'smem constant byte address 0x4 - core index']
  #allocation1 [shape = 'u32[144,128]{1,0:T(1,128)}', space=vmem, size = 0x12000, scoped, tag = 'internal scratch']
  #allocation2 [shape = 'f32[1]{0:T(128)}', space=smem, size = 0x200, scoped, tag = 'scratch operand']
  #allocation3 [shape = 'f32[1,128]{1,0:T(1,128)}', space=vmem, size = 0x200, scoped, tag = 'scratch operand']
  %s0 = inlined_call_operand.hbm [shape: f32[2], index: 0, kind: input, shape index: {}]
  %s1 = inlined_call_operand.vmem [shape: f32[1,128], index: 1, kind: input, shape index: {}]
  %s2 = inlined_call_operand.hbm [shape: f32[16,128], index: 2, kind: input, shape index: {}]
  %s3 = inlined_call_operand.hbm [shape: f32[16,128], index: 3, kind: input, shape index: {}]
  %s4 = inlined_call_operand.hbm [shape: f32[16,128], index: 4, kind: input, shape index: {}]
  %s5 = inlined_call_operand.hbm [shape: f32[16,128], index: 5, kind: input, shape index: {}]
  %s6 = inlined_call_operand.hbm [shape: f32[16,128], index: 6, kind: input, shape index: {}]
  %s7 = inlined_call_operand.hbm [shape: f32[16,128], index: 7, kind: input, shape index: {}]
  %s8 = inlined_call_operand.hbm [shape: f32[2,1,128], index: 8, kind: output, shape index: {0}]
  %s9 = inlined_call_operand.hbm [shape: f32[2,1,128], index: 9, kind: output, shape index: {1}]
  %10 = xla_tuple %s8, %s9
  %s11 = sld [smem:[#allocation0]]
  $region109: #{tpu_custom_call.1} parent=0
    _
  %s13 = ssub.s32 1, %s11
  %s14 = scalar_select 0, %s13, %s11
  $region1: #{tpu_custom_call.1} parent=0
    #allocation4 [shape = 'u8[512]{0}', space=smem, size = 0x200, scoped, tag = 'input window, operand 0, single buffered']
    #allocation5 [shape = 's32[2]{0}', space=sflag, size = 0x8, scoped, tag = 'scoped memory for tpu_custom_call.1']
    #allocation6 [shape = 's32[2]{0}', space=sflag, size = 0x8, scoped, tag = 'scoped memory for tpu_custom_call.1']
    #allocation7 [shape = 's32[2]{0}', space=sflag, size = 0x8, scoped, tag = 'scoped memory for tpu_custom_call.1']
    #allocation8 [shape = 'u8[8192]{0}', space=vmem, size = 0x2000, scoped, tag = 'input window, operand 2']
    #allocation9 [shape = 'u8[8192]{0}', space=vmem, size = 0x2000, scoped, tag = 'input window, operand 3']
    #allocation10 [shape = 's32[2]{0}', space=sflag, size = 0x8, scoped, tag = 'scoped memory for tpu_custom_call.1']
    #allocation11 [shape = 'u8[8192]{0}', space=vmem, size = 0x2000, scoped, tag = 'input window, operand 4']
    #allocation12 [shape = 'u8[8192]{0}', space=vmem, size = 0x2000, scoped, tag = 'input window, operand 5']
    #allocation13 [shape = 's32[2]{0}', space=sflag, size = 0x8, scoped, tag = 'scoped memory for tpu_custom_call.1']
    #allocation14 [shape = 'u8[8192]{0}', space=vmem, size = 0x2000, scoped, tag = 'input window, operand 6']
    #allocation15 [shape = 'u8[8192]{0}', space=vmem, size = 0x2000, scoped, tag = 'input window, operand 7']
    #allocation16 [shape = 's32[2]{0}', space=sflag, size = 0x8, scoped, tag = 'scoped memory for tpu_custom_call.1']
    #allocation17 [shape = 'u8[1024]{0}', space=vmem, size = 0x400, scoped, tag = 'output window, operand 0']
    #allocation18 [shape = 'u8[1024]{0}', space=vmem, size = 0x400, scoped, tag = 'output window, operand 1']
    #allocation19 [shape = 's32[2]{0}', space=sflag, size = 0x8, scoped, tag = 'scoped memory for tpu_custom_call.1']
    %15 = vsyncpa [#allocation7], 0
    %16 = vsyncpa [#allocation5], 0
    %s17 = scalar_lea.sflag [#allocation5], 1
    %18 = vsyncpa %s17, 0
    %19 = vsyncpa [#allocation10], 0
    %s20 = scalar_lea.sflag [#allocation10], 1
    %21 = vsyncpa %s20, 0
    %22 = vsyncpa [#allocation13], 0
    %s23 = scalar_lea.sflag [#allocation13], 1
    %24 = vsyncpa %s23, 0
    %25 = vsyncpa [#allocation16], 0
    %s26 = scalar_lea.sflag [#allocation16], 1
    %27 = vsyncpa %s26, 0
    %28 = vsyncpa [#allocation6], 0
    %s29 = scalar_lea.sflag [#allocation6], 1
    %30 = vsyncpa %s29, 0
    %31 = vsyncpa [#allocation19], 0
    %s32 = scalar_lea.sflag [#allocation19], 1
    %33 = vsyncpa %s32, 0
    loop: start=0, step=1, limit=4
    $region2: #{tpu_custom_call.1} parent=1 // loop_pre_header
      _
    $region3: #{tpu_custom_call.1} parent=1 // loop_header
      %s35 = sphi 0, %s39
      %p36 = scmp.ge.s32.totalorder %s35, 4
      %s42 = sphi 0, %s54
      %s43 = sphi 0, %s50
      %s44 = sphi 0, %s42
      %s45 = sphi 0, %s43
      %s46 = sphi 0, %s44
      %s47 = sphi 0, %s45
      %s55 = sphi 0, %s55
      %s57 = sphi 0, %s55
      %s58 = sphi 0, %s57
      %s72 = sphi 0, %s58
      %s76 = sphi 0, %s76
      %s78 = sphi 0, %s76
      %s79 = sphi 0, %s78
      %s93 = sphi 0, %s79
      %s101 = sphi 0, %s103
      %s104 = sphi 0, %s101
      %s105 = sphi 0, %s104
      %s121 = sphi 0, %s105
      %s129 = sphi 0, %s131
      %s132 = sphi 0, %s129
      %s133 = sphi 0, %s132
      %s149 = sphi 0, %s133
      %s157 = sphi 0, %s159
      %s160 = sphi 0, %s157
      %s161 = sphi 0, %s160
      %s177 = sphi 0, %s161
      %s185 = sphi 0, %s187
      %s188 = sphi 0, %s185
      %s189 = sphi 0, %s188
      %s205 = sphi 0, %s189
      %s213 = sphi 0, %s215
      %s216 = sphi 0, %s213
      %s217 = sphi 0, %s216
      %s233 = sphi 0, %s217
      %s241 = sphi 0, %s243
      %s244 = sphi 0, %s241
      %s245 = sphi 0, %s244
      %s261 = sphi 0, %s245
      %s267 = sphi 0, %s269
      %s270 = sphi 0, %s267
      %s271 = sphi 0, %s270
      %s287 = sphi 0, %s271
      %s293 = sphi 0, %s295
      %s296 = sphi 0, %s293
      %s297 = sphi 0, %s296
      %s313 = sphi 0, %s297
    $region4: #{tpu_custom_call.1} parent=1 // loop_header_branch
      %38 = sbr.rel (%p36) target = $region8
    $region5: #{tpu_custom_call.1} parent=1 // loop_body
      %s40 = ssub.s32 %s35, 1
      %s41 = ssub.s32 %s35, 2
      %s48 = sadd.s32 1, %s43
      %p49 = scmp.ge.s32.totalorder %s48, 1
      %s50 = scalar_select %p49, 0, %s48
      %s51 = sadd.s32 1, %s42
      %s52 = scalar_select %p49, %s51, %s42
      %p53 = scmp.ge.s32.totalorder %s52, 2
      %s54 = scalar_select %p53, 0, %s52
      %s56 = sadd.s32 %s55, 1
      %p59 = scmp.eq.s32.totalorder %s35, 1
      %p60 = scmp.ne.s32.totalorder %s55, %s57
      %p61 = scmp.eq.s32.totalorder %s35, 0
      %p62 = por %p60, %p61
      %p63 = scmp.ne.s32.totalorder %s55, %s57
      %p64 = scmp.eq.s32.totalorder %s40, 1
      %p65 = por %p63, %p64
      %p66 = scmp.ne.s32.totalorder %s57, %s58
      %p67 = scmp.eq.s32.totalorder %s40, 0
      %p68 = por %p66, %p67
      %p69 = scmp.ne.s32.totalorder %s57, %s58
      %p70 = scmp.eq.s32.totalorder %s41, 1
      %p71 = por %p69, %p70
      %p73 = scmp.ne.s32.totalorder %s58, %s72
      %p74 = scmp.eq.s32.totalorder %s41, 0
      %p75 = por %p73, %p74
      %s77 = sadd.s32 %s76, 1
      %p80 = scmp.eq.s32.totalorder %s35, 1
      %p81 = scmp.ne.s32.totalorder %s76, %s78
      %p82 = scmp.eq.s32.totalorder %s35, 0
      %p83 = por %p81, %p82
      %p84 = scmp.ne.s32.totalorder %s76, %s78
      %p85 = scmp.eq.s32.totalorder %s40, 1
      %p86 = por %p84, %p85
      %p87 = scmp.ne.s32.totalorder %s78, %s79
      %p88 = scmp.eq.s32.totalorder %s40, 0
      %p89 = por %p87, %p88
      %p90 = scmp.ne.s32.totalorder %s78, %s79
      %p91 = scmp.eq.s32.totalorder %s41, 1
      %p92 = por %p90, %p91
      %p94 = scmp.ne.s32.totalorder %s79, %s93
      %p95 = scmp.eq.s32.totalorder %s41, 0
      %p96 = por %p94, %p95
      %s97 = sadd.s32 %s42, %s43
      %s98 = sadd.s32 %s54, %s50
      %s99 = ssub.s32 %s97, %s98
      %p100 = scmp.eq.s32.totalorder %s99, 0
      %s102 = sadd.s32 %s101, 1
      %s103 = scalar_select %p100, %s101, %s102
      %p106 = pneg %p100
      %p107 = scmp.eq.s32.totalorder %s35, 1
      %p108 = por %p106, %p107
      %p109 = scmp.ne.s32.totalorder %s101, %s104
      %p110 = scmp.eq.s32.totalorder %s35, 0
      %p111 = por %p109, %p110
      %p112 = scmp.ne.s32.totalorder %s101, %s104
      %p113 = scmp.eq.s32.totalorder %s40, 1
      %p114 = por %p112, %p113
      %p115 = scmp.ne.s32.totalorder %s104, %s105
      %p116 = scmp.eq.s32.totalorder %s40, 0
      %p117 = por %p115, %p116
      %p118 = scmp.ne.s32.totalorder %s104, %s105
      %p119 = scmp.eq.s32.totalorder %s41, 1
      %p120 = por %p118, %p119
      %p122 = scmp.ne.s32.totalorder %s105, %s121
      %p123 = scmp.eq.s32.totalorder %s41, 0
      %p124 = por %p122, %p123
      %s125 = sadd.s32 %s42, %s43
      %s126 = sadd.s32 %s54, %s50
      %s127 = ssub.s32 %s125, %s126
      %p128 = scmp.eq.s32.totalorder %s127, 0
      %s130 = sadd.s32 %s129, 1
      %s131 = scalar_select %p128, %s129, %s130
      %p134 = pneg %p128
      %p135 = scmp.eq.s32.totalorder %s35, 1
      %p136 = por %p134, %p135
      %p137 = scmp.ne.s32.totalorder %s129, %s132
      %p138 = scmp.eq.s32.totalorder %s35, 0
      %p139 = por %p137, %p138
      %p140 = scmp.ne.s32.totalorder %s129, %s132
      %p141 = scmp.eq.s32.totalorder %s40, 1
      %p142 = por %p140, %p141
      %p143 = scmp.ne.s32.totalorder %s132, %s133
      %p144 = scmp.eq.s32.totalorder %s40, 0
      %p145 = por %p143, %p144
      %p146 = scmp.ne.s32.totalorder %s132, %s133
      %p147 = scmp.eq.s32.totalorder %s41, 1
      %p148 = por %p146, %p147
      %p150 = scmp.ne.s32.totalorder %s133, %s149
      %p151 = scmp.eq.s32.totalorder %s41, 0
      %p152 = por %p150, %p151
      %s153 = sadd.s32 %s42, %s43
      %s154 = sadd.s32 %s54, %s50
      %s155 = ssub.s32 %s153, %s154
      %p156 = scmp.eq.s32.totalorder %s155, 0
      %s158 = sadd.s32 %s157, 1
      %s159 = scalar_select %p156, %s157, %s158
      %p162 = pneg %p156
      %p163 = scmp.eq.s32.totalorder %s35, 1
      %p164 = por %p162, %p163
      %p165 = scmp.ne.s32.totalorder %s157, %s160
      %p166 = scmp.eq.s32.totalorder %s35, 0
      %p167 = por %p165, %p166
      %p168 = scmp.ne.s32.totalorder %s157, %s160
      %p169 = scmp.eq.s32.totalorder %s40, 1
      %p170 = por %p168, %p169
      %p171 = scmp.ne.s32.totalorder %s160, %s161
      %p172 = scmp.eq.s32.totalorder %s40, 0
      %p173 = por %p171, %p172
      %p174 = scmp.ne.s32.totalorder %s160, %s161
      %p175 = scmp.eq.s32.totalorder %s41, 1
      %p176 = por %p174, %p175
      %p178 = scmp.ne.s32.totalorder %s161, %s177
      %p179 = scmp.eq.s32.totalorder %s41, 0
      %p180 = por %p178, %p179
      %s181 = sadd.s32 %s42, %s43
      %s182 = sadd.s32 %s54, %s50
      %s183 = ssub.s32 %s181, %s182
      %p184 = scmp.eq.s32.totalorder %s183, 0
      %s186 = sadd.s32 %s185, 1
      %s187 = scalar_select %p184, %s185, %s186
      %p190 = pneg %p184
      %p191 = scmp.eq.s32.totalorder %s35, 1
      %p192 = por %p190, %p191
      %p193 = scmp.ne.s32.totalorder %s185, %s188
      %p194 = scmp.eq.s32.totalorder %s35, 0
      %p195 = por %p193, %p194
      %p196 = scmp.ne.s32.totalorder %s185, %s188
      %p197 = scmp.eq.s32.totalorder %s40, 1
      %p198 = por %p196, %p197
      %p199 = scmp.ne.s32.totalorder %s188, %s189
      %p200 = scmp.eq.s32.totalorder %s40, 0
      %p201 = por %p199, %p200
      %p202 = scmp.ne.s32.totalorder %s188, %s189
      %p203 = scmp.eq.s32.totalorder %s41, 1
      %p204 = por %p202, %p203
      %p206 = scmp.ne.s32.totalorder %s189, %s205
      %p207 = scmp.eq.s32.totalorder %s41, 0
      %p208 = por %p206, %p207
      %s209 = sadd.s32 %s42, %s43
      %s210 = sadd.s32 %s54, %s50
      %s211 = ssub.s32 %s209, %s210
      %p212 = scmp.eq.s32.totalorder %s211, 0
      %s214 = sadd.s32 %s213, 1
      %s215 = scalar_select %p212, %s213, %s214
      %p218 = pneg %p212
      %p219 = scmp.eq.s32.totalorder %s35, 1
      %p220 = por %p218, %p219
      %p221 = scmp.ne.s32.totalorder %s213, %s216
      %p222 = scmp.eq.s32.totalorder %s35, 0
      %p223 = por %p221, %p222
      %p224 = scmp.ne.s32.totalorder %s213, %s216
      %p225 = scmp.eq.s32.totalorder %s40, 1
      %p226 = por %p224, %p225
      %p227 = scmp.ne.s32.totalorder %s216, %s217
      %p228 = scmp.eq.s32.totalorder %s40, 0
      %p229 = por %p227, %p228
      %p230 = scmp.ne.s32.totalorder %s216, %s217
      %p231 = scmp.eq.s32.totalorder %s41, 1
      %p232 = por %p230, %p231
      %p234 = scmp.ne.s32.totalorder %s217, %s233
      %p235 = scmp.eq.s32.totalorder %s41, 0
      %p236 = por %p234, %p235
      %s237 = sadd.s32 %s42, %s43
      %s238 = sadd.s32 %s54, %s50
      %s239 = ssub.s32 %s237, %s238
      %p240 = scmp.eq.s32.totalorder %s239, 0
      %s242 = sadd.s32 %s241, 1
      %s243 = scalar_select %p240, %s241, %s242
      %p246 = pneg %p240
      %p247 = scmp.eq.s32.totalorder %s35, 1
      %p248 = por %p246, %p247
      %p249 = scmp.ne.s32.totalorder %s241, %s244
      %p250 = scmp.eq.s32.totalorder %s35, 0
      %p251 = por %p249, %p250
      %p252 = scmp.ne.s32.totalorder %s241, %s244
      %p253 = scmp.eq.s32.totalorder %s40, 1
      %p254 = por %p252, %p253
      %p255 = scmp.ne.s32.totalorder %s244, %s245
      %p256 = scmp.eq.s32.totalorder %s40, 0
      %p257 = por %p255, %p256
      %p258 = scmp.ne.s32.totalorder %s244, %s245
      %p259 = scmp.eq.s32.totalorder %s41, 1
      %p260 = por %p258, %p259
      %p262 = scmp.ne.s32.totalorder %s245, %s261
      %p263 = scmp.eq.s32.totalorder %s41, 0
      %p264 = por %p262, %p263
      %s265 = ssub.s32 %s42, %s54
      %p266 = scmp.eq.s32.totalorder %s265, 0
      %s268 = sadd.s32 %s267, 1
      %s269 = scalar_select %p266, %s267, %s268
      %p272 = pneg %p266
      %p273 = scmp.eq.s32.totalorder %s35, 1
      %p274 = por %p272, %p273
      %p275 = scmp.ne.s32.totalorder %s267, %s270
      %p276 = scmp.eq.s32.totalorder %s35, 0
      %p277 = por %p275, %p276
      %p278 = scmp.ne.s32.totalorder %s267, %s270
      %p279 = scmp.eq.s32.totalorder %s40, 1
      %p280 = por %p278, %p279
      %p281 = scmp.ne.s32.totalorder %s270, %s271
      %p282 = scmp.eq.s32.totalorder %s40, 0
      %p283 = por %p281, %p282
      %p284 = scmp.ne.s32.totalorder %s270, %s271
      %p285 = scmp.eq.s32.totalorder %s41, 1
      %p286 = por %p284, %p285
      %p288 = scmp.ne.s32.totalorder %s271, %s287
      %p289 = scmp.eq.s32.totalorder %s41, 0
      %p290 = por %p288, %p289
      %s291 = ssub.s32 %s42, %s54
      %p292 = scmp.eq.s32.totalorder %s291, 0
      %s294 = sadd.s32 %s293, 1
      %s295 = scalar_select %p292, %s293, %s294
      %p298 = pneg %p292
      %p299 = scmp.eq.s32.totalorder %s35, 1
      %p300 = por %p298, %p299
      %p301 = scmp.ne.s32.totalorder %s293, %s296
      %p302 = scmp.eq.s32.totalorder %s35, 0
      %p303 = por %p301, %p302
      %p304 = scmp.ne.s32.totalorder %s293, %s296
      %p305 = scmp.eq.s32.totalorder %s40, 1
      %p306 = por %p304, %p305
      %p307 = scmp.ne.s32.totalorder %s296, %s297
      %p308 = scmp.eq.s32.totalorder %s40, 0
      %p309 = por %p307, %p308
      %p310 = scmp.ne.s32.totalorder %s296, %s297
      %p311 = scmp.eq.s32.totalorder %s41, 1
      %p312 = por %p310, %p311
      %p314 = scmp.ne.s32.totalorder %s297, %s313
      %p315 = scmp.eq.s32.totalorder %s41, 0
      %p316 = por %p314, %p315
      %p317 = scmp.le.s32.totalorder 1, %s35
      %p318 = scmp.lt.s32.totalorder %s35, 3
      %p319 = pnand %p317, %p318
      %p320 = pneg %p319
      // Predicated region
      $region9: #{tpu_custom_call.1} parent=5 // pred_check
        _
      $region10: #{tpu_custom_call.1} parent=5 // pred_check_branch
        %322 = sbr.rel (%p319) target = $region12
      $region11: #{tpu_custom_call.1} parent=5 // pred_region
        %s323 = ssub.s32 %s35, 1
        // Predicated region
        $region13: #{tpu_custom_call.1} parent=11 // pred_check
          %p324 = pneg %p68
        $region14: #{tpu_custom_call.1} parent=11 // pred_check_branch
          %326 = sbr.rel (%p324) target = $region16
        $region15: #{tpu_custom_call.1} parent=11 // pred_region
          %s328 = ssub.s32 16, 16
          %329 = vsyncadd [#allocation7], %s328
          %332 = dma.hbm_to_smem %s0, 16, [#allocation4], [#allocation7]
        $region16: #{tpu_custom_call.1} parent=11 // pred_fallthru
          _
        // Predicated region
        $region17: #{tpu_custom_call.1} parent=11 // pred_check
          %p333 = pneg %p89
        $region18: #{tpu_custom_call.1} parent=11 // pred_check_branch
          %335 = sbr.rel (%p333) target = $region20
        $region19: #{tpu_custom_call.1} parent=11 // pred_region
          _
        $region20: #{tpu_custom_call.1} parent=11 // pred_fallthru
          _
      $region12: #{tpu_custom_call.1} parent=5 // pred_fallthru
        _
      %p336 = scmp.lt.s32.totalorder %s35, 2
      // Predicated region
      $region21: #{tpu_custom_call.1} parent=5 // pred_check
        %p337 = pneg %p336
      $region22: #{tpu_custom_call.1} parent=5 // pred_check_branch
        %339 = sbr.rel (%p337) target = $region24
      $region23: #{tpu_custom_call.1} parent=5 // pred_region
        // Predicated region
        $region25: #{tpu_custom_call.1} parent=23 // pred_check
          %p340 = pneg %p111
        $region26: #{tpu_custom_call.1} parent=23 // pred_check_branch
          %342 = sbr.rel (%p340) target = $region28
        $region27: #{tpu_custom_call.1} parent=23 // pred_region
          %s343 = sand.u32 %s101, 1
          %s344 = scalar_lea.sflag [#allocation5], %s343
          %s345 = sand.u32 %s101, 1
          %s346 = smul.addr %s345, 8
          %s347 = scalar_lea.vmem [#allocation8], %s346
          %s348 = sadd.s32 %s42, %s43
          %s350 = ssub.s32 128, 128
          %351 = vsyncadd %s344, %s350
          %s352 = smul.addr %s348, 128
          %s353 = scalar_lea.hbm %s2, %s352
          %s355 = sshll.u32 %s347, 4
          %s356 = int_to_ptr.vmem [resolvable:$true] %s355
          %358 = dma.hbm_to_vmem [thread:$0]  %s353, 128, %s356, %s344
        $region28: #{tpu_custom_call.1} parent=23 // pred_fallthru
          _
        // Predicated region
        $region29: #{tpu_custom_call.1} parent=23 // pred_check
          %p359 = pneg %p139
        $region30: #{tpu_custom_call.1} parent=23 // pred_check_branch
          %361 = sbr.rel (%p359) target = $region32
        $region31: #{tpu_custom_call.1} parent=23 // pred_region
          %s362 = sand.u32 %s35, 1
          %s363 = scalar_lea.sflag [#allocation10], %s362
          %s364 = sand.u32 %s129, 1
          %s365 = smul.addr %s364, 8
          %s366 = scalar_lea.vmem [#allocation9], %s365
          %s367 = sadd.s32 %s42, %s43
          %s369 = ssub.s32 128, 128
          %370 = vsyncadd %s363, %s369
          %s371 = smul.addr %s367, 128
          %s372 = scalar_lea.hbm %s3, %s371
          %s374 = sshll.u32 %s366, 4
          %s375 = int_to_ptr.vmem [resolvable:$true] %s374
          %377 = dma.hbm_to_vmem [thread:$0]  %s372, 128, %s375, %s363
        $region32: #{tpu_custom_call.1} parent=23 // pred_fallthru
          _
        // Predicated region
        $region33: #{tpu_custom_call.1} parent=23 // pred_check
          %p378 = pneg %p167
        $region34: #{tpu_custom_call.1} parent=23 // pred_check_branch
          %380 = sbr.rel (%p378) target = $region36
        $region35: #{tpu_custom_call.1} parent=23 // pred_region
          %s381 = sand.u32 %s35, 1
          %s382 = scalar_lea.sflag [#allocation10], %s381
          %s383 = sand.u32 %s157, 1
          %s384 = smul.addr %s383, 8
          %s385 = scalar_lea.vmem [#allocation11], %s384
          %s386 = sadd.s32 %s42, %s43
          %s388 = ssub.s32 128, 128
          %389 = vsyncadd %s382, %s388
          %s390 = smul.addr %s386, 128
          %s391 = scalar_lea.hbm %s4, %s390
          %s393 = sshll.u32 %s385, 4
          %s394 = int_to_ptr.vmem [resolvable:$true] %s393
          %396 = dma.hbm_to_vmem [thread:$0]  %s391, 128, %s394, %s382
        $region36: #{tpu_custom_call.1} parent=23 // pred_fallthru
          _
        // Predicated region
        $region37: #{tpu_custom_call.1} parent=23 // pred_check
          %p397 = pneg %p195
        $region38: #{tpu_custom_call.1} parent=23 // pred_check_branch
          %399 = sbr.rel (%p397) target = $region40
        $region39: #{tpu_custom_call.1} parent=23 // pred_region
          %s400 = sand.u32 %s35, 1
          %s401 = scalar_lea.sflag [#allocation13], %s400
          %s402 = sand.u32 %s185, 1
          %s403 = smul.addr %s402, 8
          %s404 = scalar_lea.vmem [#allocation12], %s403
          %s405 = sadd.s32 %s42, %s43
          %s407 = ssub.s32 128, 128
          %408 = vsyncadd %s401, %s407
          %s409 = smul.addr %s405, 128
          %s410 = scalar_lea.hbm %s5, %s409
          %s412 = sshll.u32 %s404, 4
          %s413 = int_to_ptr.vmem [resolvable:$true] %s412
          %415 = dma.hbm_to_vmem [thread:$0]  %s410, 128, %s413, %s401
        $region40: #{tpu_custom_call.1} parent=23 // pred_fallthru
          _
        // Predicated region
        $region41: #{tpu_custom_call.1} parent=23 // pred_check
          %p416 = pneg %p223
        $region42: #{tpu_custom_call.1} parent=23 // pred_check_branch
          %418 = sbr.rel (%p416) target = $region44
        $region43: #{tpu_custom_call.1} parent=23 // pred_region
          %s419 = sand.u32 %s35, 1
          %s420 = scalar_lea.sflag [#allocation13], %s419
          %s421 = sand.u32 %s213, 1
          %s422 = smul.addr %s421, 8
          %s423 = scalar_lea.vmem [#allocation14], %s422
          %s424 = sadd.s32 %s42, %s43
          %s426 = ssub.s32 128, 128
          %427 = vsyncadd %s420, %s426
          %s428 = smul.addr %s424, 128
          %s429 = scalar_lea.hbm %s6, %s428
          %s431 = sshll.u32 %s423, 4
          %s432 = int_to_ptr.vmem [resolvable:$true] %s431
          %434 = dma.hbm_to_vmem [thread:$0]  %s429, 128, %s432, %s420
        $region44: #{tpu_custom_call.1} parent=23 // pred_fallthru
          _
        // Predicated region
        $region45: #{tpu_custom_call.1} parent=23 // pred_check
          %p435 = pneg %p251
        $region46: #{tpu_custom_call.1} parent=23 // pred_check_branch
          %437 = sbr.rel (%p435) target = $region48
        $region47: #{tpu_custom_call.1} parent=23 // pred_region
          %s438 = sand.u32 %s241, 1
          %s439 = scalar_lea.sflag [#allocation16], %s438
          %s440 = sand.u32 %s241, 1
          %s441 = smul.addr %s440, 8
          %s442 = scalar_lea.vmem [#allocation15], %s441
          %s443 = sadd.s32 %s42, %s43
          %s445 = ssub.s32 128, 128
          %446 = vsyncadd %s439, %s445
          %s447 = smul.addr %s443, 128
          %s448 = scalar_lea.hbm %s7, %s447
          %s450 = sshll.u32 %s442, 4
          %s451 = int_to_ptr.vmem [resolvable:$true] %s450
          %453 = dma.hbm_to_vmem [thread:$0]  %s448, 128, %s451, %s439
        $region48: #{tpu_custom_call.1} parent=23 // pred_fallthru
          _
      $region24: #{tpu_custom_call.1} parent=5 // pred_fallthru
        _
      %p454 = scmp.le.s32.totalorder 1, %s35
      %p455 = scmp.lt.s32.totalorder %s35, 3
      %p456 = pnand %p454, %p455
      %p457 = pneg %p456
      // Predicated region
      $region49: #{tpu_custom_call.1} parent=5 // pred_check
        _
      $region50: #{tpu_custom_call.1} parent=5 // pred_check_branch
        %459 = sbr.rel (%p456) target = $region52
      $region51: #{tpu_custom_call.1} parent=5 // pred_region
        %s460 = ssub.s32 %s35, 1
        // Predicated region
        $region53: #{tpu_custom_call.1} parent=51 // pred_check
          %p461 = pneg %p68
        $region54: #{tpu_custom_call.1} parent=51 // pred_check_branch
          %463 = sbr.rel (%p461) target = $region56
        $region55: #{tpu_custom_call.1} parent=51 // pred_region
          %464 = dma.done [#allocation7], 16
        $region56: #{tpu_custom_call.1} parent=51 // pred_fallthru
          _
        %s465 = sand.u32 %s104, 1
        %s466 = scalar_lea.sflag [#allocation5], %s465
        %s467 = sand.u32 %s104, 1
        %s468 = smul.addr %s467, 8
        %s469 = scalar_lea.vmem [#allocation8], %s468
        // Predicated region
        $region57: #{tpu_custom_call.1} parent=51 // pred_check
          %p470 = pneg %p117
        $region58: #{tpu_custom_call.1} parent=51 // pred_check_branch
          %472 = sbr.rel (%p470) target = $region60
        $region59: #{tpu_custom_call.1} parent=51 // pred_region
          %473 = dma.done %s466, 128
        $region60: #{tpu_custom_call.1} parent=51 // pred_fallthru
          _
        %s474 = sand.u32 %s40, 1
        %s475 = scalar_lea.sflag [#allocation10], %s474
        %s476 = sand.u32 %s132, 1
        %s477 = smul.addr %s476, 8
        %s478 = scalar_lea.vmem [#allocation9], %s477
        // Predicated region
        $region61: #{tpu_custom_call.1} parent=51 // pred_check
          %p479 = pneg %p145
        $region62: #{tpu_custom_call.1} parent=51 // pred_check_branch
          %481 = sbr.rel (%p479) target = $region64
        $region63: #{tpu_custom_call.1} parent=51 // pred_region
          %482 = dma.done %s475, 128
        $region64: #{tpu_custom_call.1} parent=51 // pred_fallthru
          _
        %s483 = sand.u32 %s40, 1
        %s484 = scalar_lea.sflag [#allocation10], %s483
        %s485 = sand.u32 %s160, 1
        %s486 = smul.addr %s485, 8
        %s487 = scalar_lea.vmem [#allocation11], %s486
        // Predicated region
        $region65: #{tpu_custom_call.1} parent=51 // pred_check
          %p488 = pneg %p173
        $region66: #{tpu_custom_call.1} parent=51 // pred_check_branch
          %490 = sbr.rel (%p488) target = $region68
        $region67: #{tpu_custom_call.1} parent=51 // pred_region
          %491 = dma.done %s484, 128
        $region68: #{tpu_custom_call.1} parent=51 // pred_fallthru
          _
        %s492 = sand.u32 %s40, 1
        %s493 = scalar_lea.sflag [#allocation13], %s492
        %s494 = sand.u32 %s188, 1
        %s495 = smul.addr %s494, 8
        %s496 = scalar_lea.vmem [#allocation12], %s495
        // Predicated region
        $region69: #{tpu_custom_call.1} parent=51 // pred_check
          %p497 = pneg %p201
        $region70: #{tpu_custom_call.1} parent=51 // pred_check_branch
          %499 = sbr.rel (%p497) target = $region72
        $region71: #{tpu_custom_call.1} parent=51 // pred_region
          %500 = dma.done %s493, 128
        $region72: #{tpu_custom_call.1} parent=51 // pred_fallthru
          _
        %s501 = sand.u32 %s40, 1
        %s502 = scalar_lea.sflag [#allocation13], %s501
        %s503 = sand.u32 %s216, 1
        %s504 = smul.addr %s503, 8
        %s505 = scalar_lea.vmem [#allocation14], %s504
        // Predicated region
        $region73: #{tpu_custom_call.1} parent=51 // pred_check
          %p506 = pneg %p229
        $region74: #{tpu_custom_call.1} parent=51 // pred_check_branch
          %508 = sbr.rel (%p506) target = $region76
        $region75: #{tpu_custom_call.1} parent=51 // pred_region
          %509 = dma.done %s502, 128
        $region76: #{tpu_custom_call.1} parent=51 // pred_fallthru
          _
        %s510 = sand.u32 %s244, 1
        %s511 = scalar_lea.sflag [#allocation16], %s510
        %s512 = sand.u32 %s244, 1
        %s513 = smul.addr %s512, 8
        %s514 = scalar_lea.vmem [#allocation15], %s513
        // Predicated region
        $region77: #{tpu_custom_call.1} parent=51 // pred_check
          %p515 = pneg %p257
        $region78: #{tpu_custom_call.1} parent=51 // pred_check_branch
          %517 = sbr.rel (%p515) target = $region80
        $region79: #{tpu_custom_call.1} parent=51 // pred_region
          %518 = dma.done %s511, 128
        $region80: #{tpu_custom_call.1} parent=51 // pred_fallthru
          _
        %519 = sfence
        %p520 = pneg %p68
        %p521 = pneg %p65
        %p522 = pneg %p89
        %p523 = pneg %p86
        %s524 = sand.u32 %s104, 1
        %s525 = scalar_lea.sflag [#allocation5], %s524
        %s526 = sand.u32 %s104, 1
        %s527 = smul.addr %s526, 8
        %s528 = scalar_lea.vmem [#allocation8], %s527
        %p529 = pneg %p117
        %p530 = pneg %p114
        %s531 = sand.u32 %s40, 1
        %s532 = scalar_lea.sflag [#allocation10], %s531
        %s533 = sand.u32 %s132, 1
        %s534 = smul.addr %s533, 8
        %s535 = scalar_lea.vmem [#allocation9], %s534
        %p536 = pneg %p145
        %p537 = pneg %p142
        %s538 = sand.u32 %s40, 1
        %s539 = scalar_lea.sflag [#allocation10], %s538
        %s540 = sand.u32 %s160, 1
        %s541 = smul.addr %s540, 8
        %s542 = scalar_lea.vmem [#allocation11], %s541
        %p543 = pneg %p173
        %p544 = pneg %p170
        %s545 = sand.u32 %s40, 1
        %s546 = scalar_lea.sflag [#allocation13], %s545
        %s547 = sand.u32 %s188, 1
        %s548 = smul.addr %s547, 8
        %s549 = scalar_lea.vmem [#allocation12], %s548
        %p550 = pneg %p201
        %p551 = pneg %p198
        %s552 = sand.u32 %s40, 1
        %s553 = scalar_lea.sflag [#allocation13], %s552
        %s554 = sand.u32 %s216, 1
        %s555 = smul.addr %s554, 8
        %s556 = scalar_lea.vmem [#allocation14], %s555
        %p557 = pneg %p229
        %p558 = pneg %p226
        %s559 = sand.u32 %s244, 1
        %s560 = scalar_lea.sflag [#allocation16], %s559
        %s561 = sand.u32 %s244, 1
        %s562 = smul.addr %s561, 8
        %s563 = scalar_lea.vmem [#allocation15], %s562
        %p564 = pneg %p257
        %p565 = pneg %p254
        %p566 = pneg %p283
        %p567 = pneg %p280
        %s568 = sand.u32 %s270, 1
        %s569 = scalar_lea.sflag [#allocation6], %s568
        %s570 = sand.u32 %s270, 1
        %s571 = scalar_lea.vmem [#allocation17], %s570
        %p572 = pneg %p309
        %p573 = pneg %p306
        %s574 = sand.u32 %s296, 1
        %s575 = scalar_lea.sflag [#allocation19], %s574
        %s576 = sand.u32 %s296, 1
        %s577 = scalar_lea.vmem [#allocation18], %s576
        %s578 = sadd.s32 %s44, %s45
        %s579 = sadd.s32 %s44, %s45
        %s580 = sadd.s32 %s44, %s45
        %s581 = sadd.s32 %s44, %s45
        %s582 = sadd.s32 %s44, %s45
        %s583 = sadd.s32 %s44, %s45
        %p584 = scmp.eq.s32.totalorder %s45, 0
        // Predicated region
        $region81: #{tpu_custom_call.1} parent=51 // pred_check
          %p585 = pneg %p584
        $region82: #{tpu_custom_call.1} parent=51 // pred_check_branch
          %587 = sbr.rel (%p585) target = $region84
        $region83: #{tpu_custom_call.1} parent=51 // pred_region
          %s588 = scalar_lea.smem [#allocation2], 0
          %589 = sst [smem:[%s588]] 0.0
          %590 = vst [vmem:[#allocation3] sm:$0x1] 0.0
        $region84: #{tpu_custom_call.1} parent=51 // pred_fallthru
          _
        %s591 = sld [smem:[#allocation4]]
        %v592 = vstv %s591
        %v593 = vrcp.pop %v592
        %s594 = vtos %v593
        %s595 = sld [smem:[#allocation4 + $0x1]]
        %v596 = vstv %s595
        %v597 = vrcp.pop %v596
        %s598 = vtos %v597
        %v599 = vld [vmem:[%s1] sm:$0x1]
        %v600 = vld [vmem:[%s469] sm:$0xff]
        %v601 = vstv %s594
        %v602 = vmul.f32 %v600, %v601
        %603 = vmax.xlane.f32.xlu0 %v602
        %v604 = vpop.xlane.xlu0 %603
        %v605 = vsub.f32 %v602, %v604
        %v606 = vmul.f32 %v605, 1.442695
        %v607 = vpow.pop %v606
        %608 = vadd.xlane.f32.xlu0 %v607
        %v609 = vpop.xlane.xlu0 %608
        %v610 = vlog2.pop %v609
        %v611 = vmul.f32 %v610, 0.6931472
        %vm612 = vcmask 7168
        %v613 = vsel %vm612, %v611, 0.0
        %614 = vadd.xlane.f32.xlu0 %v613
        %v615 = vpop.xlane.xlu0 %614
        %v616 = vrot.slane %v615, 4
        %v617 = vadd.f32 %v615, %v616
        %v618 = vrot.slane %v617, 2
        %v619 = vadd.f32 %v617, %v618
        %v620 = vrot.slane %v619, 1
        %v621 = vadd.f32 %v619, %v620
        %s622 = vtos %v621
        %v623 = vld [vmem:[%s505] sm:$0xff]
        %v624 = vrot.slane %v623, 4
        %v625 = vadd.f32 %v623, %v624
        %v626 = vrot.slane %v625, 2
        %v627 = vadd.f32 %v625, %v626
        %v628 = vrot.slane %v627, 1
        %v629 = vadd.f32 %v627, %v628
        %v631 = vlaneseq
        %v632 = vshrl.u32 %v631, 7
        %v633 = vsub.s32 0, %v632
        %v634 = vrot.slane %v599, %v633
        %v636 = vsub.f32 %v623, %v634
        %v637 = vstv %s598
        %v638 = vmul.f32 %v636, %v637
        %639 = vmax.xlane.f32.xlu0 %v638
        %v640 = vpop.xlane.xlu0 %639
        %v641 = vsub.f32 %v638, %v640
        %v642 = vmul.f32 %v641, 1.442695
        %v643 = vpow.pop %v642
        %644 = vadd.xlane.f32.xlu0 %v643
        %v645 = vpop.xlane.xlu0 %644
        %v646 = vrcp.pop %v645
        %v647 = vmul.f32 %v643, %v646
        %v648 = vmul.f32 %v647, %v605
        %649 = vadd.xlane.f32.xlu0 %v648
        %v650 = vpop.xlane.xlu0 %649
        %v651 = vrot.slane %v650, 4
        %v652 = vadd.f32 %v650, %v651
        %v653 = vrot.slane %v652, 2
        %v654 = vadd.f32 %v652, %v653
        %v655 = vrot.slane %v654, 1
        %v656 = vadd.f32 %v654, %v655
        %s657 = vtos %v656
        %s658 = sadd.f32 %s657, 0.0
        %s659 = sadd.f32 %s622, 0.0
        %v660 = vld [vmem:[%s478] sm:$0xff]
        %v661 = vmul.f32 %v660, %v601
        %662 = vmax.xlane.f32.xlu0 %v661
        %v663 = vpop.xlane.xlu0 %662
        %v664 = vsub.f32 %v661, %v663
        %v665 = vmul.f32 %v664, 1.442695
        %v666 = vpow.pop %v665
        %667 = vadd.xlane.f32.xlu0 %v666
        %v668 = vpop.xlane.xlu0 %667
        %v669 = vlog2.pop %v668
        %v670 = vmul.f32 %v669, 0.6931472
        %v671 = vsel %vm612, %v670, 0.0
        %672 = vadd.xlane.f32.xlu0 %v671
        %v673 = vpop.xlane.xlu0 %672
        %v674 = vrot.slane %v673, 4
        %v675 = vadd.f32 %v673, %v674
        %v676 = vrot.slane %v675, 2
        %v677 = vadd.f32 %v675, %v676
        %v678 = vrot.slane %v677, 1
        %v679 = vadd.f32 %v677, %v678
        %s680 = vtos %v679
        %v681 = vld [vmem:[%s514] sm:$0xff]
        %v682 = vrot.slane %v681, 4
        %v683 = vadd.f32 %v681, %v682
        %v684 = vrot.slane %v683, 2
        %v685 = vadd.f32 %v683, %v684
        %v686 = vrot.slane %v685, 1
        %v687 = vadd.f32 %v685, %v686
        %v688 = vsub.f32 %v681, %v634
        %v689 = vmul.f32 %v688, %v637
        %690 = vmax.xlane.f32.xlu0 %v689
        %v691 = vpop.xlane.xlu0 %690
        %v692 = vsub.f32 %v689, %v691
        %v693 = vmul.f32 %v692, 1.442695
        %v694 = vpow.pop %v693
        %695 = vadd.xlane.f32.xlu0 %v694
        %v696 = vpop.xlane.xlu0 %695
        %v697 = vrcp.pop %v696
        %v698 = vmul.f32 %v694, %v697
        %v699 = vmul.f32 %v698, %v664
        %700 = vadd.xlane.f32.xlu0 %v699
        %v701 = vpop.xlane.xlu0 %700
        %v702 = vrot.slane %v701, 4
        %v703 = vadd.f32 %v701, %v702
        %v704 = vrot.slane %v703, 2
        %v705 = vadd.f32 %v703, %v704
        %v706 = vrot.slane %v705, 1
        %v707 = vadd.f32 %v705, %v706
        %s708 = vtos %v707
        %s709 = sadd.f32 %s658, %s708
        %s710 = sadd.f32 %s659, %s680
        %v711 = vadd.f32 %v605, %v664
        %v712 = vadd.f32 %v647, %v698
        %v713 = vadd.f32 %v629, %v687
        %v714 = vld [vmem:[%s487] sm:$0xff]
        %v715 = vmul.f32 %v714, %v601
        %716 = vmax.xlane.f32.xlu0 %v715
        %v717 = vpop.xlane.xlu0 %716
        %v718 = vsub.f32 %v715, %v717
        %v719 = vmul.f32 %v718, 1.442695
        %v720 = vpow.pop %v719
        %721 = vadd.xlane.f32.xlu0 %v720
        %v722 = vpop.xlane.xlu0 %721
        %v723 = vlog2.pop %v722
        %v724 = vmul.f32 %v723, 0.6931472
        %v725 = vsel %vm612, %v724, 0.0
        %726 = vadd.xlane.f32.xlu0 %v725
        %v727 = vpop.xlane.xlu0 %726
        %v728 = vrot.slane %v727, 4
        %v729 = vadd.f32 %v727, %v728
        %v730 = vrot.slane %v729, 2
        %v731 = vadd.f32 %v729, %v730
        %v732 = vrot.slane %v731, 1
        %v733 = vadd.f32 %v731, %v732
        %s734 = vtos %v733
        %s735 = sadd.f32 %s710, %s734
        %v736 = vadd.f32 %v711, %v718
        %v737 = vld [vmem:[%s496] sm:$0xff]
        %v738 = vmul.f32 %v737, %v601
        %739 = vmax.xlane.f32.xlu0 %v738
        %v740 = vpop.xlane.xlu0 %739
        %v741 = vsub.f32 %v738, %v740
        %v742 = vmul.f32 %v741, 1.442695
        %v743 = vpow.pop %v742
        %744 = vadd.xlane.f32.xlu0 %v743
        %v745 = vpop.xlane.xlu0 %744
        %v746 = vlog2.pop %v745
        %v747 = vmul.f32 %v746, 0.6931472
        %v748 = vsel %vm612, %v747, 0.0
        %749 = vadd.xlane.f32.xlu0 %v748
        %v750 = vpop.xlane.xlu0 %749
        %v751 = vrot.slane %v750, 4
        %v752 = vadd.f32 %v750, %v751
        %v753 = vrot.slane %v752, 2
        %v754 = vadd.f32 %v752, %v753
        %v755 = vrot.slane %v754, 1
        %v756 = vadd.f32 %v754, %v755
        %s757 = vtos %v756
        %s758 = sadd.f32 %s735, %s757
        %v759 = vadd.f32 %v736, %v741
        %v760 = vmul.f32 %v712, %v759
        %761 = vadd.xlane.f32.xlu0 %v760
        %v762 = vpop.xlane.xlu0 %761
        %v763 = vrot.slane %v762, 4
        %v764 = vadd.f32 %v762, %v763
        %v765 = vrot.slane %v764, 2
        %v766 = vadd.f32 %v764, %v765
        %v767 = vrot.slane %v766, 1
        %v768 = vadd.f32 %v766, %v767
        %s769 = vtos %v768
        %s770 = smul.f32 %s758, 2.0
        %s771 = ssub.f32 %s769, %s770
        %s772 = ssub.f32 %s709, %s710
        %s773 = ssub.f32 %s771, %s772
        %s774 = sld [smem:[#allocation2]]
        %s775 = sadd.f32 %s774, %s773
        %s776 = scalar_lea.smem [#allocation2], 0
        %777 = sst [smem:[%s776]] %s775
        %v778 = vld [vmem:[#allocation3] sm:$0x1]
        %v779 = vadd.f32 %v778, %v713
        %780 = vst [vmem:[#allocation3] sm:$0x1] %v779
        // Predicated region
        $region85: #{tpu_custom_call.1} parent=51 // pred_check
          %p781 = pneg %p584
        $region86: #{tpu_custom_call.1} parent=51 // pred_check_branch
          %783 = sbr.rel (%p781) target = $region88
        $region87: #{tpu_custom_call.1} parent=51 // pred_region
          %s784 = sld [smem:[#allocation2]]
          %v785 = vstv %s784
          %786 = vst [vmem:[%s571] sm:$0x1] %v785
          %v787 = vld [vmem:[#allocation3] sm:$0x1]
          %788 = vst [vmem:[%s577] sm:$0x1] %v787
        $region88: #{tpu_custom_call.1} parent=51 // pred_fallthru
          _
        %s789 = sand.u32 %s270, 1
        %s790 = scalar_lea.sflag [#allocation6], %s789
        %s791 = sand.u32 %s270, 1
        %s792 = scalar_lea.vmem [#allocation17], %s791
        %s793 = sand.u32 %s296, 1
        %s794 = scalar_lea.sflag [#allocation19], %s793
        %s795 = sand.u32 %s296, 1
        %s796 = scalar_lea.vmem [#allocation18], %s795
        // Predicated region
        $region89: #{tpu_custom_call.1} parent=51 // pred_check
          %p797 = pneg %p280
        $region90: #{tpu_custom_call.1} parent=51 // pred_check_branch
          %799 = sbr.rel (%p797) target = $region92
        $region91: #{tpu_custom_call.1} parent=51 // pred_region
          %s801 = ssub.s32 16, 16
          %802 = vsyncadd %s790, %s801
          %s803 = smul.addr %s44, 16
          %s804 = scalar_lea.hbm %s8, %s803
          %s806 = sshll.u32 %s792, 4
          %s807 = int_to_ptr.vmem [resolvable:$true] %s806
          %809 = dma.vmem_to_hbm [thread:$0]  %s807, 16, %s804, %s790
        $region92: #{tpu_custom_call.1} parent=51 // pred_fallthru
          _
        // Predicated region
        $region93: #{tpu_custom_call.1} parent=51 // pred_check
          %p810 = pneg %p306
        $region94: #{tpu_custom_call.1} parent=51 // pred_check_branch
          %812 = sbr.rel (%p810) target = $region96
        $region95: #{tpu_custom_call.1} parent=51 // pred_region
          %s814 = ssub.s32 16, 16
          %815 = vsyncadd %s794, %s814
          %s816 = smul.addr %s44, 16
          %s817 = scalar_lea.hbm %s9, %s816
          %s819 = sshll.u32 %s796, 4
          %s820 = int_to_ptr.vmem [resolvable:$true] %s819
          %822 = dma.vmem_to_hbm [thread:$0]  %s820, 16, %s817, %s794
        $region96: #{tpu_custom_call.1} parent=51 // pred_fallthru
          _
      $region52: #{tpu_custom_call.1} parent=5 // pred_fallthru
        _
      %p823 = scmp.le.s32.totalorder 2, %s35
      // Predicated region
      $region97: #{tpu_custom_call.1} parent=5 // pred_check
        %p824 = pneg %p823
      $region98: #{tpu_custom_call.1} parent=5 // pred_check_branch
        %826 = sbr.rel (%p824) target = $region100
      $region99: #{tpu_custom_call.1} parent=5 // pred_region
        %s827 = ssub.s32 %s35, 2
        // Predicated region
        $region101: #{tpu_custom_call.1} parent=99 // pred_check
          %p828 = pneg %p286
        $region102: #{tpu_custom_call.1} parent=99 // pred_check_branch
          %830 = sbr.rel (%p828) target = $region104
        $region103: #{tpu_custom_call.1} parent=99 // pred_region
          %s831 = sand.u32 %s271, 1
          %s832 = scalar_lea.sflag [#allocation6], %s831
          %s833 = sand.u32 %s271, 1
          %s834 = scalar_lea.vmem [#allocation17], %s833
          %835 = dma.done %s832, 16
        $region104: #{tpu_custom_call.1} parent=99 // pred_fallthru
          _
        // Predicated region
        $region105: #{tpu_custom_call.1} parent=99 // pred_check
          %p836 = pneg %p312
        $region106: #{tpu_custom_call.1} parent=99 // pred_check_branch
          %838 = sbr.rel (%p836) target = $region108
        $region107: #{tpu_custom_call.1} parent=99 // pred_region
          %s839 = sand.u32 %s297, 1
          %s840 = scalar_lea.sflag [#allocation19], %s839
          %s841 = sand.u32 %s297, 1
          %s842 = scalar_lea.vmem [#allocation18], %s841
          %843 = dma.done %s840, 16
        $region108: #{tpu_custom_call.1} parent=99 // pred_fallthru
          _
      $region100: #{tpu_custom_call.1} parent=5 // pred_fallthru
        _
    $region6: #{tpu_custom_call.1} parent=1 // loop_footer
      %s39 = sadd.s32 1, %s35
    $region7: #{tpu_custom_call.1} parent=1 // loop_footer_branch
      %34 = sbr.rel target = $region3
    $region8: #{tpu_custom_call.1} parent=1 // loop_exit
      _
    %844 = vsyncpa [#allocation5], 1
    %s845 = scalar_lea.sflag [#allocation5], 1
    %846 = vsyncpa %s845, 1
    %847 = vsyncpa [#allocation10], 1
    %s848 = scalar_lea.sflag [#allocation10], 1
    %849 = vsyncpa %s848, 1
    %850 = vsyncpa [#allocation13], 1
    %s851 = scalar_lea.sflag [#allocation13], 1
    %852 = vsyncpa %s851, 1
    %853 = vsyncpa [#allocation16], 1
    %s854 = scalar_lea.sflag [#allocation16], 1
    %855 = vsyncpa %s854, 1
    %856 = vsyncpa [#allocation6], 1
    %s857 = scalar_lea.sflag [#allocation6], 1
    %858 = vsyncpa %s857, 1
    %859 = vsyncpa [#allocation19], 1
    %s860 = scalar_lea.sflag [#allocation19], 1
    %861 = vsyncpa %s860, 1
    %862 = vsyncpa [#allocation7], 1
    %s863 = scalar_lea.sflag [#allocation7], 1
    %864 = vsyncpa %s863, 1

</llo_original>
